<compile_context>
chip_gen: v5e
topology: v5e:2x2
jax: 0.10.0
libtpu: 0.0.40
codegen_flags: <defaults>
</compile_context>

<pallas_src>
import jax
import jax.numpy as jnp
from jax import lax
from jax.experimental import pallas as pl
from jax.experimental.pallas import tpu as pltpu

N_RULES = 6     # n_rules
N_IN = 4        # n_in_varl
N_OUT = 1       # n_out_varl (scalar output per sample)


def ts_fuzzy_kernel(x_ref, p_ref, o_ref):
    """One batch tile.  x_ref: (D, TB); p_ref: (R, 3D+2) packed params; o_ref: (1, TB)."""
    x = x_ref[...]                          # (D, TB)  batch on lanes, f32
    p = p_ref[...]                          # (R, 3D+2) = [gamma | beta | a | c | a0]
    D = x.shape[0]

    gamma = p[:, 0 * D:1 * D]               # (R, D)  == -0.5 / sig^2
    beta = p[:, 1 * D:2 * D]                # (R, D)  == -2 * gamma * cen
    a = p[:, 2 * D:3 * D]                   # (R, D)  == conq[:, :-1]
    c = p[:, 3 * D:3 * D + 1]               # (R, 1)  == sum_d gamma * cen^2
    a0 = p[:, 3 * D + 1:3 * D + 2]          # (R, 1)  == conq[:, -1]

    hi = lax.Precision.HIGHEST              # f32-accurate MXU passes (keeps 1e-5 tol)

    # Both D-contractions on the MXU (VALU now only does x*x, exp args and the combine):
    #   s[r,b]   = sum_d gamma*(x - cen)^2   (expanded form; always <= 0)
    #   lin[r,b] = a0[r] + sum_d a[r,d] * x[d,b]
    s = (jnp.dot(gamma, x * x, preferred_element_type=jnp.float32, precision=hi)
         + jnp.dot(beta, x, preferred_element_type=jnp.float32, precision=hi)
         + c)                               # (R, TB)
    lin = (jnp.dot(a, x, preferred_element_type=jnp.float32, precision=hi)
           + a0)                            # (R, TB)

    # Stable normalized TSK combine: shift by per-sample max before exp
    # (cancels exactly in num/den; keeps padded lanes finite too).
    m = jnp.max(s, axis=0, keepdims=True)                    # (1, TB) sublane reduce (XLU)
    rule = jnp.exp(s - m)                                    # (R, TB) one exp/(rule,sample)
    # TODO(synk): optional bf16 exp on v6e/v7x (~2x EUP) -- would loosen the 1e-5 tolerance.
    num = jnp.sum(rule * lin, axis=0, keepdims=True)         # (1, TB)
    den = jnp.sum(rule, axis=0, keepdims=True)               # (1, TB), >= 1 by construction
    o_ref[...] = (num / den).astype(o_ref.dtype)             # exact divide on (1,TB) only


def ts_fuzzy_forward(x, cen, sig, conq, *, tb=65536, x_feature_major=False):
    """Wrapper: parameter glue + batch-tiled pallas_call (lane-dense layout).

    x: (B, D) like the PyTorch module, or (D, B) if x_feature_major=True (skips the
    wrapper-side transpose HBM pass).  Returns (B,) f32, matching layer_out.
    """
    if x_feature_major:
        D, B = x.shape
        xT = x.astype(jnp.float32)                            # already (D, B)
    else:
        B, D = x.shape
        xT = x.astype(jnp.float32).T                          # (D, B)
    R = cen.shape[0]

    cen = cen.astype(jnp.float32)
    sig = sig.astype(jnp.float32)
    conq = conq.astype(jnp.float32)

    # Hoisted parameter math (quadratic expansion of the Gaussian exponent).
    gamma = -0.5 / (sig * sig)                                # (R, D)
    beta = -2.0 * gamma * cen                                 # (R, D)
    c = jnp.sum(gamma * cen * cen, axis=1, keepdims=True)     # (R, 1)
    a = conq[:, :-1]                                          # (R, D)
    a0 = conq[:, -1:]                                         # (R, 1)
    params = jnp.concatenate([gamma, beta, a, c, a0], axis=1)  # (R, 3D+2) single fetch

    # Batch on the lane axis.  Clamp the tile to the 128-padded batch, then pad the
    # batch only up to that tile (at most one partially wasted tile for large B).
    b128 = ((B + 127) // 128) * 128
    tb = max(128, min(tb, b128))
    bp = ((b128 + tb - 1) // tb) * tb
    xt = jnp.zeros((D, bp), jnp.float32).at[:, :B].set(xT)    # (D, Bp)

    grid = (bp // tb,)
    out = pl.pallas_call(
        ts_fuzzy_kernel,
        out_shape=jax.ShapeDtypeStruct((1, bp), jnp.float32),
        grid=grid,
        in_specs=[
            pl.BlockSpec((D, tb), lambda i: (0, i)),          # x tile, batch on lanes
            pl.BlockSpec((R, 3 * D + 2), lambda i: (0, 0)),   # packed params, VMEM-resident
        ],
        out_specs=pl.BlockSpec((1, tb), lambda i: (0, i)),    # lane-dense output
        compiler_params=pltpu.CompilerParams(
            dimension_semantics=("parallel",),                # shard B tiles across cores
            vmem_limit_bytes=48 * 1024 * 1024),               # headroom on v7x's 64 MiB
    )(xt, params)
    return out[0, :B]                                         # (B,) matches PyTorch output


def ts_fuzzy_reference(x, cen, sig, conq):
    """Pure-JAX reference mirroring the PyTorch forward exactly."""
    fuzz = jnp.exp(-(x[:, None, :] - cen) ** 2 / (2.0 * sig ** 2))   # (B,R,D)
    rule = jnp.prod(fuzz, axis=2)                                    # (B,R)
    inv_frn = 1.0 / jnp.sum(rule, axis=1, keepdims=True)             # (B,1)
    norm = rule * inv_frn
    a0 = conq[:, -1][None, :]
    a = conq[:, :-1]
    lin = a0 + jnp.sum(a[None, :, :] * x[:, None, :], axis=2)        # (B,R)
    return jnp.sum(norm * lin, axis=1)                               # (B,)


if __name__ == "__main__":
    key = jax.random.PRNGKey(0)
    k_x, k_cen, k_sig, k_cq, k_cq0 = jax.random.split(key, 5)

    B = 8
    x = jax.random.normal(k_x, (B, N_IN), dtype=jnp.float32)

    # Deterministic parameter init (shapes from the module __init__):
    #   cen, sig : (n_rules, n_in_varl);  conq : (n_rules, n_in_varl + 1)
    cen = jax.random.normal(k_cen, (N_RULES, N_IN), dtype=jnp.float32)
    sig = jax.random.uniform(k_sig, (N_RULES, N_IN), dtype=jnp.float32,
                             minval=0.5, maxval=1.5)
    # mimic init_conseqence_para: small random linear coeffs, first column a
    # label-range bias (labels unavailable -> use U[0, 1))
    conq = (jax.random.uniform(k_cq, (N_RULES, N_IN + 1), dtype=jnp.float32)
            * 2.0 - 1.0) * 0.01
    conq = conq.at[:, 0].set(
        jax.random.uniform(k_cq0, (N_RULES,), dtype=jnp.float32))

    y = ts_fuzzy_forward(x, cen, sig, conq)
    jax.block_until_ready(y)

    y_ref = ts_fuzzy_reference(x, cen, sig, conq)
    assert y.shape == (B,)
    assert jnp.allclose(y, y_ref, rtol=1e-5, atol=1e-5), (y, y_ref)

    print("KERNEL_OK")
</pallas_src>

<mosaic_0001>
module attributes {stable_mosaic.version = 11 : i64} {
  func.func @ts_fuzzy_kernel(%arg0: i32, %arg1: memref<4x128xf32, #tpu.memory_space<vmem>>, %arg2: memref<6x14xf32, #tpu.memory_space<vmem>>, %arg3: memref<1x128xf32, #tpu.memory_space<vmem>>) attributes {dimension_semantics = [#tpu.dimension_semantics<parallel>], iteration_bounds = array<i64: 1>, scalar_prefetch = 0 : i64, scratch_operands = 0 : i64, tpu.core_type = #tpu.core_type<tc>, window_params = [{transform_indices = @transform_0, window_bounds = array<i64: 4, 128>}, {pipeline_mode = #tpu.pipeline_mode<synchronous>, transform_indices = @transform_1, window_bounds = array<i64: 6, 14>}, {transform_indices = @transform_2, window_bounds = array<i64: 1, 128>}]} {
    %c0 = arith.constant 0 : index
    %c0_0 = arith.constant 0 : index
    %0 = vector.load %arg1[%c0, %c0_0] : memref<4x128xf32, #tpu.memory_space<vmem>>, vector<4x128xf32>
    %c0_1 = arith.constant 0 : index
    %c0_2 = arith.constant 0 : index
    %1 = vector.load %arg2[%c0_1, %c0_2] : memref<6x14xf32, #tpu.memory_space<vmem>>, vector<6x14xf32>
    %2 = vector.extract_strided_slice %1 {offsets = [0, 0], sizes = [6, 4], strides = [1, 1]} : vector<6x14xf32> to vector<6x4xf32>
    %3 = vector.extract_strided_slice %1 {offsets = [0, 4], sizes = [6, 4], strides = [1, 1]} : vector<6x14xf32> to vector<6x4xf32>
    %4 = vector.extract_strided_slice %1 {offsets = [0, 8], sizes = [6, 4], strides = [1, 1]} : vector<6x14xf32> to vector<6x4xf32>
    %5 = vector.extract_strided_slice %1 {offsets = [0, 12], sizes = [6, 1], strides = [1, 1]} : vector<6x14xf32> to vector<6x1xf32>
    %6 = vector.extract_strided_slice %1 {offsets = [0, 13], sizes = [6, 1], strides = [1, 1]} : vector<6x14xf32> to vector<6x1xf32>
    %7 = arith.mulf %0, %0 : vector<4x128xf32>
    %cst = arith.constant dense<0.000000e+00> : vector<6x128xf32>
    %8 = tpu.matmul %2, %7, %cst {dimension_numbers = #tpu.dot_dimension_numbers<[1], [0], [0], [1], [0, 0, 1, 1], [], []>, precision = #tpu.contract_precision<fp32>} : vector<6x4xf32>, vector<4x128xf32>, vector<6x128xf32> -> vector<6x128xf32>
    %cst_3 = arith.constant dense<0.000000e+00> : vector<6x128xf32>
    %9 = tpu.matmul %3, %0, %cst_3 {dimension_numbers = #tpu.dot_dimension_numbers<[1], [0], [0], [1], [0, 0, 1, 1], [], []>, precision = #tpu.contract_precision<fp32>} : vector<6x4xf32>, vector<4x128xf32>, vector<6x128xf32> -> vector<6x128xf32>
    %10 = arith.addf %8, %9 : vector<6x128xf32>
    %11 = vector.broadcast %5 : vector<6x1xf32> to vector<6x128xf32>
    %12 = arith.addf %10, %11 : vector<6x128xf32>
    %cst_4 = arith.constant dense<0.000000e+00> : vector<6x128xf32>
    %13 = tpu.matmul %4, %0, %cst_4 {dimension_numbers = #tpu.dot_dimension_numbers<[1], [0], [0], [1], [0, 0, 1, 1], [], []>, precision = #tpu.contract_precision<fp32>} : vector<6x4xf32>, vector<4x128xf32>, vector<6x128xf32> -> vector<6x128xf32>
    %14 = vector.broadcast %6 : vector<6x1xf32> to vector<6x128xf32>
    %15 = arith.addf %13, %14 : vector<6x128xf32>
    %cst_5 = arith.constant dense<0xFF800000> : vector<128xf32>
    %16 = vector.multi_reduction <maximumf>, %12, %cst_5 [0] : vector<6x128xf32> to vector<128xf32>
    %17 = vector.shape_cast %16 : vector<128xf32> to vector<1x128xf32>
    %18 = vector.broadcast %17 : vector<1x128xf32> to vector<6x128xf32>
    %19 = arith.subf %12, %18 : vector<6x128xf32>
    %20 = math.exp %19 : vector<6x128xf32>
    %21 = arith.mulf %20, %15 : vector<6x128xf32>
    %cst_6 = arith.constant dense<0.000000e+00> : vector<128xf32>
    %22 = vector.multi_reduction <add>, %21, %cst_6 [0] : vector<6x128xf32> to vector<128xf32>
    %23 = vector.shape_cast %22 : vector<128xf32> to vector<1x128xf32>
    %cst_7 = arith.constant dense<0.000000e+00> : vector<128xf32>
    %24 = vector.multi_reduction <add>, %20, %cst_7 [0] : vector<6x128xf32> to vector<128xf32>
    %25 = vector.shape_cast %24 : vector<128xf32> to vector<1x128xf32>
    %26 = arith.divf %23, %25 : vector<1x128xf32>
    %c0_8 = arith.constant 0 : index
    %c0_9 = arith.constant 0 : index
    %27 = vector.load %arg3[%c0_8, %c0_9] : memref<1x128xf32, #tpu.memory_space<vmem>>, vector<1x128xf32>
    tpu.vector_store %arg3[%c0_8, %c0_9], %26 {strides = array<i32>} : memref<1x128xf32, #tpu.memory_space<vmem>>, vector<1x128xf32>,
    return
  }
  func.func @transform_0(%arg0: i32) -> (i32, i32) {
    %c0_i32 = arith.constant 0 : i32
    %c0_i32_0 = arith.constant 0 : i32
    return %c0_i32, %arg0 : i32, i32
  }
  func.func @transform_1(%arg0: i32) -> (i32, i32) {
    %c0_i32 = arith.constant 0 : i32
    %c0_i32_0 = arith.constant 0 : i32
    %c0_i32_1 = arith.constant 0 : i32
    return %c0_i32, %c0_i32_0 : i32, i32
  }
  func.func @transform_2(%arg0: i32) -> (i32, i32) {
    %c0_i32 = arith.constant 0 : i32
    %c0_i32_0 = arith.constant 0 : i32
    return %c0_i32, %arg0 : i32, i32
  }
}

</mosaic_0001>

<llo_original>
// kernel: tpu_custom_call.1
$region0: #{tpu_custom_call.1}
  #allocation0 [shape = 'u32[]', space=smem, size = 0x4, offset = 0x4, fixed_abs, tag = 'smem constant byte address 0x4 - core index']
  #allocation1 [shape = 'u32[72,128]{1,0:T(1,128)}', space=vmem, size = 0x9000, scoped, tag = 'internal scratch']
  %s0 = inlined_call_operand.hbm [shape: f32[4,128], index: 0, kind: input, shape index: {}]
  %s1 = inlined_call_operand.hbm [shape: f32[6,14], index: 1, kind: input, shape index: {}]
  %s2 = inlined_call_operand.hbm [shape: f32[1,128], index: 2, kind: output, shape index: {}]
  %s3 = sld [smem:[#allocation0]]
  $region26: #{tpu_custom_call.1} parent=0
    _
  %s5 = ssub.s32 1, %s3
  %s6 = scalar_select 0, %s5, %s3
  $region1: #{tpu_custom_call.1} parent=0
    #allocation2 [shape = 'u8[2048]{0}', space=vmem, size = 0x800, scoped, tag = 'input window, operand 0, single buffered']
    #allocation3 [shape = 's32[1]{0}', space=sflag, size = 0x4, scoped, tag = 'scoped memory for tpu_custom_call.1']
    #allocation4 [shape = 's32[1]{0}', space=sflag, size = 0x4, scoped, tag = 'scoped memory for tpu_custom_call.1']
    #allocation5 [shape = 'u8[4096]{0}', space=vmem, size = 0x1000, scoped, tag = 'input window, operand 1, single buffered']
    #allocation6 [shape = 's32[1]{0}', space=sflag, size = 0x4, scoped, tag = 'scoped memory for tpu_custom_call.1']
    #allocation7 [shape = 'u8[512]{0}', space=vmem, size = 0x400, scoped, tag = 'output window, operand 0, single buffered']
    %7 = vsyncpa [#allocation3], 0
    %8 = vsyncpa [#allocation6], 0
    %9 = vsyncpa [#allocation4], 0
    // Predicated region
    $region2: #{tpu_custom_call.1} parent=1 // pred_check
      _
    $region3: #{tpu_custom_call.1} parent=1 // pred_check_branch
      %11 = sbr.rel (0) target = $region5
    $region4: #{tpu_custom_call.1} parent=1 // pred_region
      %13 = vsyncadd [#allocation3], 0
      %s15 = sshll.u32 %s0, 4
      %s16 = int_to_ptr.hbm [resolvable:$true] %s15
      %s17 = sshll.u32 [#allocation2], 4
      %s18 = int_to_ptr.vmem [resolvable:$true] %s17
      %20 = dma.hbm_to_vmem [thread:$0]  %s16, 64, %s18, [#allocation3]
    $region5: #{tpu_custom_call.1} parent=1 // pred_fallthru
      _
    // Predicated region
    $region6: #{tpu_custom_call.1} parent=1 // pred_check
      _
    $region7: #{tpu_custom_call.1} parent=1 // pred_check_branch
      %22 = sbr.rel (0) target = $region9
    $region8: #{tpu_custom_call.1} parent=1 // pred_region
      %24 = vsyncadd [#allocation6], 0
      %s26 = sshll.u32 %s1, 4
      %s27 = int_to_ptr.hbm [resolvable:$true] %s26
      %s28 = sshll.u32 [#allocation5], 4
      %s29 = int_to_ptr.vmem [resolvable:$true] %s28
      %31 = dma.hbm_to_vmem [thread:$0]  %s27, 128, %s29, [#allocation6]
    $region9: #{tpu_custom_call.1} parent=1 // pred_fallthru
      _
    // Predicated region
    $region10: #{tpu_custom_call.1} parent=1 // pred_check
      _
    $region11: #{tpu_custom_call.1} parent=1 // pred_check_branch
      %33 = sbr.rel (0) target = $region13
    $region12: #{tpu_custom_call.1} parent=1 // pred_region
      %35 = dma.done [#allocation3], 64
    $region13: #{tpu_custom_call.1} parent=1 // pred_fallthru
      _
    // Predicated region
    $region14: #{tpu_custom_call.1} parent=1 // pred_check
      _
    $region15: #{tpu_custom_call.1} parent=1 // pred_check_branch
      %37 = sbr.rel (0) target = $region17
    $region16: #{tpu_custom_call.1} parent=1 // pred_region
      %39 = dma.done [#allocation6], 128
    $region17: #{tpu_custom_call.1} parent=1 // pred_fallthru
      _
    %v40 = vld [vmem:[#allocation2] sm:$0xf]
    %v41 = vld [vmem:[#allocation5] sm:$0x3f]
    %v42 = vmul.f32 %v40, %v40
    %44 = vrot.lane.b32.xlu0 %v41, 124
    %v45 = vpop.permute.xlu0 %44
    %vm46 = vcmask 31744
    %v47 = vsel %vm46, %v45, 0
    %vm49 = vcmask 1043456
    %v51 = vsel %vm49, %v40, 0
    %53 = vmatpush.msra.mxu0 0.0
    %54 = vmatpush.msra.mxu0 0.0
    %55 = vmatpush.msra.mxu0 0.0
    %56 = vmatpush.msra.mxu0 0.0
    %57 = vmatpush.msra.mxu0 0.0
    %58 = vmatpush.msra.mxu0 0.0
    %59 = vmatpush.msra.mxu0 0.0
    %60 = vmatpush.msra.mxu0 0.0
    %61 = vmatpush.msra.mxu0 0.0
    %62 = vmatpush.msra.mxu0 0.0
    %63 = vmatpush.msra.mxu0 0.0
    %64 = vmatpush.msra.mxu0 0.0
    %65 = vmatpush.msra.mxu0 0.0
    %66 = vmatpush.msra.mxu0 0.0
    %67 = vmatpush.msra.mxu0 0.0
    %v68 = vand.u32 %v51, 4294901760
    %69 = vmatpush.msra.mxu0 %v68
    %v70 = vand.u32 %v47, 4294901760
    %v71 = vsub.f32 %v47, %v70
    %v72 = vand.u32 %v71, 4294901760
    %v73 = vsub.f32 %v71, %v72
    %v74 = vand.u32 %v73, 4294901760
    %75 = vmatmul.f32.gmra.mxu0 %v74
    %v76 = vpop.f32.mrf.mxu0
    %v77 = vadd.f32 0.0, %v76
    %78 = vdwg.mxu0
    %79 = vmatpush.msra.mxu0 0.0
    %80 = vmatpush.msra.mxu0 0.0
    %81 = vmatpush.msra.mxu0 0.0
    %82 = vmatpush.msra.mxu0 0.0
    %83 = vmatpush.msra.mxu0 0.0
    %84 = vmatpush.msra.mxu0 0.0
    %85 = vmatpush.msra.mxu0 0.0
    %86 = vmatpush.msra.mxu0 0.0
    %87 = vmatpush.msra.mxu0 0.0
    %88 = vmatpush.msra.mxu0 0.0
    %89 = vmatpush.msra.mxu0 0.0
    %90 = vmatpush.msra.mxu0 0.0
    %91 = vmatpush.msra.mxu0 0.0
    %92 = vmatpush.msra.mxu0 0.0
    %93 = vmatpush.msra.mxu0 0.0
    %v94 = vand.u32 %v51, 4294901760
    %v95 = vsub.f32 %v51, %v94
    %v96 = vand.u32 %v95, 4294901760
    %v97 = vsub.f32 %v95, %v96
    %v98 = vand.u32 %v97, 4294901760
    %99 = vmatpush.msra.mxu0 %v98
    %v100 = vand.u32 %v47, 4294901760
    %101 = vmatmul.f32.gmra.mxu0 %v100
    %v102 = vpop.f32.mrf.mxu0
    %v103 = vadd.f32 %v77, %v102
    %104 = vdwg.mxu0
    %105 = vmatpush.msra.mxu0 0.0
    %106 = vmatpush.msra.mxu0 0.0
    %107 = vmatpush.msra.mxu0 0.0
    %108 = vmatpush.msra.mxu0 0.0
    %109 = vmatpush.msra.mxu0 0.0
    %110 = vmatpush.msra.mxu0 0.0
    %111 = vmatpush.msra.mxu0 0.0
    %112 = vmatpush.msra.mxu0 0.0
    %113 = vmatpush.msra.mxu0 0.0
    %114 = vmatpush.msra.mxu0 0.0
    %115 = vmatpush.msra.mxu0 0.0
    %116 = vmatpush.msra.mxu0 0.0
    %117 = vmatpush.msra.mxu0 0.0
    %118 = vmatpush.msra.mxu0 0.0
    %119 = vmatpush.msra.mxu0 0.0
    %v120 = vand.u32 %v51, 4294901760
    %v121 = vsub.f32 %v51, %v120
    %122 = vmatpush.msra.mxu0 %v121
    %v123 = vand.u32 %v47, 4294901760
    %v124 = vsub.f32 %v47, %v123
    %125 = vmatmul.f32.gmra.mxu0 %v124
    %v126 = vpop.f32.mrf.mxu0
    %v127 = vadd.f32 %v103, %v126
    %128 = vdwg.mxu0
    %129 = vmatpush.msra.mxu0 0.0
    %130 = vmatpush.msra.mxu0 0.0
    %131 = vmatpush.msra.mxu0 0.0
    %132 = vmatpush.msra.mxu0 0.0
    %133 = vmatpush.msra.mxu0 0.0
    %134 = vmatpush.msra.mxu0 0.0
    %135 = vmatpush.msra.mxu0 0.0
    %136 = vmatpush.msra.mxu0 0.0
    %137 = vmatpush.msra.mxu0 0.0
    %138 = vmatpush.msra.mxu0 0.0
    %139 = vmatpush.msra.mxu0 0.0
    %140 = vmatpush.msra.mxu0 0.0
    %141 = vmatpush.msra.mxu0 0.0
    %142 = vmatpush.msra.mxu0 0.0
    %143 = vmatpush.msra.mxu0 0.0
    %v144 = vand.u32 %v51, 4294901760
    %145 = vmatpush.msra.mxu0 %v144
    %v146 = vand.u32 %v47, 4294901760
    %v147 = vsub.f32 %v47, %v146
    %v148 = vand.u32 %v147, 4294901760
    %149 = vmatmul.f32.gmra.mxu0 %v148
    %v150 = vpop.f32.mrf.mxu0
    %v151 = vadd.f32 %v127, %v150
    %152 = vdwg.mxu0
    %153 = vmatpush.msra.mxu0 0.0
    %154 = vmatpush.msra.mxu0 0.0
    %155 = vmatpush.msra.mxu0 0.0
    %156 = vmatpush.msra.mxu0 0.0
    %157 = vmatpush.msra.mxu0 0.0
    %158 = vmatpush.msra.mxu0 0.0
    %159 = vmatpush.msra.mxu0 0.0
    %160 = vmatpush.msra.mxu0 0.0
    %161 = vmatpush.msra.mxu0 0.0
    %162 = vmatpush.msra.mxu0 0.0
    %163 = vmatpush.msra.mxu0 0.0
    %164 = vmatpush.msra.mxu0 0.0
    %165 = vmatpush.msra.mxu0 0.0
    %166 = vmatpush.msra.mxu0 0.0
    %167 = vmatpush.msra.mxu0 0.0
    %v168 = vand.u32 %v51, 4294901760
    %v169 = vsub.f32 %v51, %v168
    %v170 = vand.u32 %v169, 4294901760
    %171 = vmatpush.msra.mxu0 %v170
    %v172 = vand.u32 %v47, 4294901760
    %173 = vmatmul.f32.gmra.mxu0 %v172
    %v174 = vpop.f32.mrf.mxu0
    %v175 = vadd.f32 %v151, %v174
    %176 = vdwg.mxu0
    %177 = vmatpush.msra.mxu0 0.0
    %178 = vmatpush.msra.mxu0 0.0
    %179 = vmatpush.msra.mxu0 0.0
    %180 = vmatpush.msra.mxu0 0.0
    %181 = vmatpush.msra.mxu0 0.0
    %182 = vmatpush.msra.mxu0 0.0
    %183 = vmatpush.msra.mxu0 0.0
    %184 = vmatpush.msra.mxu0 0.0
    %185 = vmatpush.msra.mxu0 0.0
    %186 = vmatpush.msra.mxu0 0.0
    %187 = vmatpush.msra.mxu0 0.0
    %188 = vmatpush.msra.mxu0 0.0
    %189 = vmatpush.msra.mxu0 0.0
    %190 = vmatpush.msra.mxu0 0.0
    %191 = vmatpush.msra.mxu0 0.0
    %v192 = vand.u32 %v51, 4294901760
    %193 = vmatpush.msra.mxu0 %v192
    %v194 = vand.u32 %v47, 4294901760
    %195 = vmatmul.f32.gmra.mxu0 %v194
    %v196 = vpop.f32.mrf.mxu0
    %v197 = vadd.f32 %v175, %v196
    %198 = vdwg.mxu0
    %v199 = vsel %vm46, %v41, 0
    %v202 = vsel %vm49, %v42, 0
    %204 = vmatpush.msra.mxu0 0.0
    %205 = vmatpush.msra.mxu0 0.0
    %206 = vmatpush.msra.mxu0 0.0
    %207 = vmatpush.msra.mxu0 0.0
    %208 = vmatpush.msra.mxu0 0.0
    %209 = vmatpush.msra.mxu0 0.0
    %210 = vmatpush.msra.mxu0 0.0
    %211 = vmatpush.msra.mxu0 0.0
    %212 = vmatpush.msra.mxu0 0.0
    %213 = vmatpush.msra.mxu0 0.0
    %214 = vmatpush.msra.mxu0 0.0
    %215 = vmatpush.msra.mxu0 0.0
    %216 = vmatpush.msra.mxu0 0.0
    %217 = vmatpush.msra.mxu0 0.0
    %218 = vmatpush.msra.mxu0 0.0
    %v219 = vand.u32 %v202, 4294901760
    %220 = vmatpush.msra.mxu0 %v219
    %v221 = vand.u32 %v199, 4294901760
    %v222 = vsub.f32 %v199, %v221
    %v223 = vand.u32 %v222, 4294901760
    %v224 = vsub.f32 %v222, %v223
    %v225 = vand.u32 %v224, 4294901760
    %226 = vmatmul.f32.gmra.mxu0 %v225
    %v227 = vpop.f32.mrf.mxu0
    %v228 = vadd.f32 %v197, %v227
    %229 = vdwg.mxu0
    %230 = vmatpush.msra.mxu0 0.0
    %231 = vmatpush.msra.mxu0 0.0
    %232 = vmatpush.msra.mxu0 0.0
    %233 = vmatpush.msra.mxu0 0.0
    %234 = vmatpush.msra.mxu0 0.0
    %235 = vmatpush.msra.mxu0 0.0
    %236 = vmatpush.msra.mxu0 0.0
    %237 = vmatpush.msra.mxu0 0.0
    %238 = vmatpush.msra.mxu0 0.0
    %239 = vmatpush.msra.mxu0 0.0
    %240 = vmatpush.msra.mxu0 0.0
    %241 = vmatpush.msra.mxu0 0.0
    %242 = vmatpush.msra.mxu0 0.0
    %243 = vmatpush.msra.mxu0 0.0
    %244 = vmatpush.msra.mxu0 0.0
    %v245 = vand.u32 %v202, 4294901760
    %v246 = vsub.f32 %v202, %v245
    %v247 = vand.u32 %v246, 4294901760
    %v248 = vsub.f32 %v246, %v247
    %v249 = vand.u32 %v248, 4294901760
    %250 = vmatpush.msra.mxu0 %v249
    %v251 = vand.u32 %v199, 4294901760
    %252 = vmatmul.f32.gmra.mxu0 %v251
    %v253 = vpop.f32.mrf.mxu0
    %v254 = vadd.f32 %v228, %v253
    %255 = vdwg.mxu0
    %256 = vmatpush.msra.mxu0 0.0
    %257 = vmatpush.msra.mxu0 0.0
    %258 = vmatpush.msra.mxu0 0.0
    %259 = vmatpush.msra.mxu0 0.0
    %260 = vmatpush.msra.mxu0 0.0
    %261 = vmatpush.msra.mxu0 0.0
    %262 = vmatpush.msra.mxu0 0.0
    %263 = vmatpush.msra.mxu0 0.0
    %264 = vmatpush.msra.mxu0 0.0
    %265 = vmatpush.msra.mxu0 0.0
    %266 = vmatpush.msra.mxu0 0.0
    %267 = vmatpush.msra.mxu0 0.0
    %268 = vmatpush.msra.mxu0 0.0
    %269 = vmatpush.msra.mxu0 0.0
    %270 = vmatpush.msra.mxu0 0.0
    %v271 = vand.u32 %v202, 4294901760
    %v272 = vsub.f32 %v202, %v271
    %273 = vmatpush.msra.mxu0 %v272
    %v274 = vand.u32 %v199, 4294901760
    %v275 = vsub.f32 %v199, %v274
    %276 = vmatmul.f32.gmra.mxu0 %v275
    %v277 = vpop.f32.mrf.mxu0
    %v278 = vadd.f32 %v254, %v277
    %279 = vdwg.mxu0
    %280 = vmatpush.msra.mxu0 0.0
    %281 = vmatpush.msra.mxu0 0.0
    %282 = vmatpush.msra.mxu0 0.0
    %283 = vmatpush.msra.mxu0 0.0
    %284 = vmatpush.msra.mxu0 0.0
    %285 = vmatpush.msra.mxu0 0.0
    %286 = vmatpush.msra.mxu0 0.0
    %287 = vmatpush.msra.mxu0 0.0
    %288 = vmatpush.msra.mxu0 0.0
    %289 = vmatpush.msra.mxu0 0.0
    %290 = vmatpush.msra.mxu0 0.0
    %291 = vmatpush.msra.mxu0 0.0
    %292 = vmatpush.msra.mxu0 0.0
    %293 = vmatpush.msra.mxu0 0.0
    %294 = vmatpush.msra.mxu0 0.0
    %v295 = vand.u32 %v202, 4294901760
    %296 = vmatpush.msra.mxu0 %v295
    %v297 = vand.u32 %v199, 4294901760
    %v298 = vsub.f32 %v199, %v297
    %v299 = vand.u32 %v298, 4294901760
    %300 = vmatmul.f32.gmra.mxu0 %v299
    %v301 = vpop.f32.mrf.mxu0
    %v302 = vadd.f32 %v278, %v301
    %303 = vdwg.mxu0
    %304 = vmatpush.msra.mxu0 0.0
    %305 = vmatpush.msra.mxu0 0.0
    %306 = vmatpush.msra.mxu0 0.0
    %307 = vmatpush.msra.mxu0 0.0
    %308 = vmatpush.msra.mxu0 0.0
    %309 = vmatpush.msra.mxu0 0.0
    %310 = vmatpush.msra.mxu0 0.0
    %311 = vmatpush.msra.mxu0 0.0
    %312 = vmatpush.msra.mxu0 0.0
    %313 = vmatpush.msra.mxu0 0.0
    %314 = vmatpush.msra.mxu0 0.0
    %315 = vmatpush.msra.mxu0 0.0
    %316 = vmatpush.msra.mxu0 0.0
    %317 = vmatpush.msra.mxu0 0.0
    %318 = vmatpush.msra.mxu0 0.0
    %v319 = vand.u32 %v202, 4294901760
    %v320 = vsub.f32 %v202, %v319
    %v321 = vand.u32 %v320, 4294901760
    %322 = vmatpush.msra.mxu0 %v321
    %v323 = vand.u32 %v199, 4294901760
    %324 = vmatmul.f32.gmra.mxu0 %v323
    %v325 = vpop.f32.mrf.mxu0
    %v326 = vadd.f32 %v302, %v325
    %327 = vdwg.mxu0
    %328 = vmatpush.msra.mxu0 0.0
    %329 = vmatpush.msra.mxu0 0.0
    %330 = vmatpush.msra.mxu0 0.0
    %331 = vmatpush.msra.mxu0 0.0
    %332 = vmatpush.msra.mxu0 0.0
    %333 = vmatpush.msra.mxu0 0.0
    %334 = vmatpush.msra.mxu0 0.0
    %335 = vmatpush.msra.mxu0 0.0
    %336 = vmatpush.msra.mxu0 0.0
    %337 = vmatpush.msra.mxu0 0.0
    %338 = vmatpush.msra.mxu0 0.0
    %339 = vmatpush.msra.mxu0 0.0
    %340 = vmatpush.msra.mxu0 0.0
    %341 = vmatpush.msra.mxu0 0.0
    %342 = vmatpush.msra.mxu0 0.0
    %v343 = vand.u32 %v202, 4294901760
    %344 = vmatpush.msra.mxu0 %v343
    %v345 = vand.u32 %v199, 4294901760
    %346 = vmatmul.f32.gmra.mxu0 %v345
    %v347 = vpop.f32.mrf.mxu0
    %v348 = vadd.f32 %v326, %v347
    %349 = vdwg.mxu0
    %350 = vset.pattern.permute.xlu0 12
    %351 = vperm.xlu0 %350, %v41
    %v352 = vpop.permute.xlu0 %351
    %v354 = vadd.f32 %v348, %v352
    %355 = vset.pattern.permute.xlu0 13
    %356 = vperm.xlu0 %355, %v41
    %v357 = vpop.permute.xlu0 %356
    %359 = vrot.lane.b32.xlu0 %v41, 120
    %v360 = vpop.permute.xlu0 %359
    %v361 = vsel %vm46, %v360, 0
    %363 = vmatpush.msra.mxu0 0.0
    %364 = vmatpush.msra.mxu0 0.0
    %365 = vmatpush.msra.mxu0 0.0
    %366 = vmatpush.msra.mxu0 0.0
    %367 = vmatpush.msra.mxu0 0.0
    %368 = vmatpush.msra.mxu0 0.0
    %369 = vmatpush.msra.mxu0 0.0
    %370 = vmatpush.msra.mxu0 0.0
    %371 = vmatpush.msra.mxu0 0.0
    %372 = vmatpush.msra.mxu0 0.0
    %373 = vmatpush.msra.mxu0 0.0
    %374 = vmatpush.msra.mxu0 0.0
    %375 = vmatpush.msra.mxu0 0.0
    %376 = vmatpush.msra.mxu0 0.0
    %377 = vmatpush.msra.mxu0 0.0
    %v378 = vand.u32 %v51, 4294901760
    %379 = vmatpush.msra.mxu0 %v378
    %v380 = vand.u32 %v361, 4294901760
    %v381 = vsub.f32 %v361, %v380
    %v382 = vand.u32 %v381, 4294901760
    %v383 = vsub.f32 %v381, %v382
    %v384 = vand.u32 %v383, 4294901760
    %385 = vmatmul.f32.gmra.mxu0 %v384
    %v386 = vpop.f32.mrf.mxu0
    %v387 = vadd.f32 %v357, %v386
    %388 = vdwg.mxu0
    %389 = vmatpush.msra.mxu0 0.0
    %390 = vmatpush.msra.mxu0 0.0
    %391 = vmatpush.msra.mxu0 0.0
    %392 = vmatpush.msra.mxu0 0.0
    %393 = vmatpush.msra.mxu0 0.0
    %394 = vmatpush.msra.mxu0 0.0
    %395 = vmatpush.msra.mxu0 0.0
    %396 = vmatpush.msra.mxu0 0.0
    %397 = vmatpush.msra.mxu0 0.0
    %398 = vmatpush.msra.mxu0 0.0
    %399 = vmatpush.msra.mxu0 0.0
    %400 = vmatpush.msra.mxu0 0.0
    %401 = vmatpush.msra.mxu0 0.0
    %402 = vmatpush.msra.mxu0 0.0
    %403 = vmatpush.msra.mxu0 0.0
    %v404 = vand.u32 %v51, 4294901760
    %v405 = vsub.f32 %v51, %v404
    %v406 = vand.u32 %v405, 4294901760
    %v407 = vsub.f32 %v405, %v406
    %v408 = vand.u32 %v407, 4294901760
    %409 = vmatpush.msra.mxu0 %v408
    %v410 = vand.u32 %v361, 4294901760
    %411 = vmatmul.f32.gmra.mxu0 %v410
    %v412 = vpop.f32.mrf.mxu0
    %v413 = vadd.f32 %v387, %v412
    %414 = vdwg.mxu0
    %415 = vmatpush.msra.mxu0 0.0
    %416 = vmatpush.msra.mxu0 0.0
    %417 = vmatpush.msra.mxu0 0.0
    %418 = vmatpush.msra.mxu0 0.0
    %419 = vmatpush.msra.mxu0 0.0
    %420 = vmatpush.msra.mxu0 0.0
    %421 = vmatpush.msra.mxu0 0.0
    %422 = vmatpush.msra.mxu0 0.0
    %423 = vmatpush.msra.mxu0 0.0
    %424 = vmatpush.msra.mxu0 0.0
    %425 = vmatpush.msra.mxu0 0.0
    %426 = vmatpush.msra.mxu0 0.0
    %427 = vmatpush.msra.mxu0 0.0
    %428 = vmatpush.msra.mxu0 0.0
    %429 = vmatpush.msra.mxu0 0.0
    %v430 = vand.u32 %v51, 4294901760
    %v431 = vsub.f32 %v51, %v430
    %432 = vmatpush.msra.mxu0 %v431
    %v433 = vand.u32 %v361, 4294901760
    %v434 = vsub.f32 %v361, %v433
    %435 = vmatmul.f32.gmra.mxu0 %v434
    %v436 = vpop.f32.mrf.mxu0
    %v437 = vadd.f32 %v413, %v436
    %438 = vdwg.mxu0
    %439 = vmatpush.msra.mxu0 0.0
    %440 = vmatpush.msra.mxu0 0.0
    %441 = vmatpush.msra.mxu0 0.0
    %442 = vmatpush.msra.mxu0 0.0
    %443 = vmatpush.msra.mxu0 0.0
    %444 = vmatpush.msra.mxu0 0.0
    %445 = vmatpush.msra.mxu0 0.0
    %446 = vmatpush.msra.mxu0 0.0
    %447 = vmatpush.msra.mxu0 0.0
    %448 = vmatpush.msra.mxu0 0.0
    %449 = vmatpush.msra.mxu0 0.0
    %450 = vmatpush.msra.mxu0 0.0
    %451 = vmatpush.msra.mxu0 0.0
    %452 = vmatpush.msra.mxu0 0.0
    %453 = vmatpush.msra.mxu0 0.0
    %v454 = vand.u32 %v51, 4294901760
    %455 = vmatpush.msra.mxu0 %v454
    %v456 = vand.u32 %v361, 4294901760
    %v457 = vsub.f32 %v361, %v456
    %v458 = vand.u32 %v457, 4294901760
    %459 = vmatmul.f32.gmra.mxu0 %v458
    %v460 = vpop.f32.mrf.mxu0
    %v461 = vadd.f32 %v437, %v460
    %462 = vdwg.mxu0
    %463 = vmatpush.msra.mxu0 0.0
    %464 = vmatpush.msra.mxu0 0.0
    %465 = vmatpush.msra.mxu0 0.0
    %466 = vmatpush.msra.mxu0 0.0
    %467 = vmatpush.msra.mxu0 0.0
    %468 = vmatpush.msra.mxu0 0.0
    %469 = vmatpush.msra.mxu0 0.0
    %470 = vmatpush.msra.mxu0 0.0
    %471 = vmatpush.msra.mxu0 0.0
    %472 = vmatpush.msra.mxu0 0.0
    %473 = vmatpush.msra.mxu0 0.0
    %474 = vmatpush.msra.mxu0 0.0
    %475 = vmatpush.msra.mxu0 0.0
    %476 = vmatpush.msra.mxu0 0.0
    %477 = vmatpush.msra.mxu0 0.0
    %v478 = vand.u32 %v51, 4294901760
    %v479 = vsub.f32 %v51, %v478
    %v480 = vand.u32 %v479, 4294901760
    %481 = vmatpush.msra.mxu0 %v480
    %v482 = vand.u32 %v361, 4294901760
    %483 = vmatmul.f32.gmra.mxu0 %v482
    %v484 = vpop.f32.mrf.mxu0
    %v485 = vadd.f32 %v461, %v484
    %486 = vdwg.mxu0
    %487 = vmatpush.msra.mxu0 0.0
    %488 = vmatpush.msra.mxu0 0.0
    %489 = vmatpush.msra.mxu0 0.0
    %490 = vmatpush.msra.mxu0 0.0
    %491 = vmatpush.msra.mxu0 0.0
    %492 = vmatpush.msra.mxu0 0.0
    %493 = vmatpush.msra.mxu0 0.0
    %494 = vmatpush.msra.mxu0 0.0
    %495 = vmatpush.msra.mxu0 0.0
    %496 = vmatpush.msra.mxu0 0.0
    %497 = vmatpush.msra.mxu0 0.0
    %498 = vmatpush.msra.mxu0 0.0
    %499 = vmatpush.msra.mxu0 0.0
    %500 = vmatpush.msra.mxu0 0.0
    %501 = vmatpush.msra.mxu0 0.0
    %v502 = vand.u32 %v51, 4294901760
    %503 = vmatpush.msra.mxu0 %v502
    %v504 = vand.u32 %v361, 4294901760
    %505 = vmatmul.f32.gmra.mxu0 %v504
    %v506 = vpop.f32.mrf.mxu0
    %v507 = vadd.f32 %v485, %v506
    %508 = vdwg.mxu0
    %vm509 = vcmask 1045504
    %v510 = vsel %vm509, %v354, -inf
    %v511 = vrot.slane %v510, 4
    %v512 = vmax.f32 %v510, %v511
    %v513 = vrot.slane %v512, 2
    %v514 = vmax.f32 %v512, %v513
    %v515 = vrot.slane %v514, 1
    %v516 = vmax.f32 %v514, %v515
    %v517 = vsub.f32 %v354, %v516
    %v518 = vmul.f32 %v517, 1.442695
    %v519 = vpow.pop %v518
    %v520 = vmul.f32 %v519, %v507
    %v521 = vsel %vm509, %v520, 0.0
    %v522 = vrot.slane %v521, 4
    %v523 = vadd.f32 %v521, %v522
    %v524 = vrot.slane %v523, 2
    %v525 = vadd.f32 %v523, %v524
    %v526 = vrot.slane %v525, 1
    %v527 = vadd.f32 %v525, %v526
    %v528 = vsel %vm509, %v519, 0.0
    %v529 = vrot.slane %v528, 4
    %v530 = vadd.f32 %v528, %v529
    %v531 = vrot.slane %v530, 2
    %v532 = vadd.f32 %v530, %v531
    %v533 = vrot.slane %v532, 1
    %v534 = vadd.f32 %v532, %v533
    %v535 = vrcp.pop %v534
    %v536 = vmul.f32 %v534, %v535
    %v537 = vsub.f32 1.0, %v536
    %v538 = vmul.f32 %v535, %v537
    %v539 = vadd.f32 %v535, %v538
    %vm540 = vweird.f32 %v534
    %vm541 = vweird.f32 %v535
    %vm542 = vmor %vm540, %vm541
    %v543 = vsel %vm542, %v535, %v539
    %v544 = vand.u32 2147483647, %v534
    %vm545 = vcmp.eq.f32.partialorder %v544, 8.507059e+37
    %v546 = vand.u32 %v534, 2147483648
    %v547 = vor.u32 1.1754944e-38, %v546
    %v548 = vsel %vm545, %v547, %v543
    %v549 = vmul.f32 %v527, %v548
    %550 = vst [vmem:[#allocation7] sm:$0x1] %v549
    // Predicated region
    $region18: #{tpu_custom_call.1} parent=1 // pred_check
      _
    $region19: #{tpu_custom_call.1} parent=1 // pred_check_branch
      %552 = sbr.rel (0) target = $region21
    $region20: #{tpu_custom_call.1} parent=1 // pred_region
      %554 = vsyncadd [#allocation4], 0
      %s556 = sshll.u32 [#allocation7], 4
      %s557 = int_to_ptr.vmem [resolvable:$true] %s556
      %s558 = sshll.u32 %s2, 4
      %s559 = int_to_ptr.hbm [resolvable:$true] %s558
      %561 = dma.vmem_to_hbm [thread:$0]  %s557, 16, %s559, [#allocation4]
    $region21: #{tpu_custom_call.1} parent=1 // pred_fallthru
      _
    // Predicated region
    $region22: #{tpu_custom_call.1} parent=1 // pred_check
      _
    $region23: #{tpu_custom_call.1} parent=1 // pred_check_branch
      %563 = sbr.rel (0) target = $region25
    $region24: #{tpu_custom_call.1} parent=1 // pred_region
      %565 = dma.done [#allocation4], 16
    $region25: #{tpu_custom_call.1} parent=1 // pred_fallthru
      _
    %566 = vsyncpa [#allocation3], 1
    %567 = vsyncpa [#allocation6], 1
    %568 = vsyncpa [#allocation4], 1

</llo_original>
